<compile_context>
chip_gen: v7x
topology: tpu7x:2x2x1
jax: 0.10.0
libtpu: 0.0.40
codegen_flags: <defaults>
</compile_context>

<pallas_src>
import jax
import jax.numpy as jnp
from jax.experimental import pallas as pl
from jax.experimental.pallas import tpu as pltpu

BN_EPS = 1e-5
H1 = 128
H2 = 64


def actor_kernel(x_ref, w1_ref, b1_ref, w2_ref, b2_ref, w3_ref, b3_ref, o_ref):
    x = x_ref[...]                                             # (TB, obs_dim), f32 or bf16

    # fc1 + relu  (MXU accumulates in f32; bias add / relu in f32)
    h1 = jnp.dot(x, w1_ref[...], preferred_element_type=jnp.float32) + b1_ref[...]
    h1 = jnp.maximum(h1, 0.0)                                  # (TB, 128) f32

    # BatchNorm1d (eval) has been folded into w2/b2 in prepare_params (exact fold:
    # bn is affine, fc2 is linear).

    # fc2 + tanh  (cast only at the MXU boundary; tanh stays f32)
    h2 = jnp.dot(h1.astype(w2_ref.dtype), w2_ref[...],
                 preferred_element_type=jnp.float32) + b2_ref[...]
    h2 = jnp.tanh(h2)                                          # (TB, 64) f32

    # Dropout(0.3): identity in eval mode.
    # TODO(synk): training-mode dropout (stochastic mask via pltpu.prng_*) not implemented.

    # fc3 + sigmoid on the narrow (TB, action_dim) slab only.
    logits = jnp.dot(h2.astype(w3_ref.dtype), w3_ref[...],
                     preferred_element_type=jnp.float32) + b3_ref[...]
    o_ref[...] = jax.nn.sigmoid(logits).astype(o_ref.dtype)    # (TB, action_dim)


def _round_up(x, m):
    return ((x + m - 1) // m) * m


def _choose_tile_b(B):
    """Large tiles (fewer grid steps / bigger DMAs) but >=2 steps when possible
    so v7x's two TensorCores both get work on the 'parallel' batch axis."""
    if B <= 8:
        return B                      # block dim == full array dim (satisfies (8,128) rule)
    return min(4096, _round_up(-(-B // 2), 8))


def prepare_params(params, io_dtype=jnp.float32):
    """One-time prep (cache the result): fold eval-mode BatchNorm into fc2 and cast
    the weight matrices to the kernel I/O dtype.  Biases stay f32 (tiny, and keeps
    all elementwise work in f32 inside the kernel)."""
    s = params["gamma"] * jax.lax.rsqrt(params["rvar"] + BN_EPS)      # (1, 128)
    t = params["beta"] - params["rmean"] * s                          # (1, 128)
    w2f = params["w2"] * s.reshape(-1, 1)                             # (128, 64)
    b2f = params["b2"] + t @ params["w2"]                             # (1, 64)
    return dict(
        w1=params["w1"].astype(io_dtype), b1=params["b1"].astype(jnp.float32),
        w2=w2f.astype(io_dtype),          b2=b2f.astype(jnp.float32),
        w3=params["w3"].astype(io_dtype), b3=params["b3"].astype(jnp.float32),
    )


def actor_forward(obs, prep, *, tile_b=None):
    """obs: (B, obs_dim). prep: output of prepare_params. Returns (B, action_dim)
    in the prepared I/O dtype."""
    B, obs_dim = obs.shape
    action_dim = prep["w3"].shape[1]
    io_dtype = prep["w1"].dtype
    obs = obs.astype(io_dtype)

    if tile_b is None:
        tile_b = _choose_tile_b(B)
    grid = (pl.cdiv(B, tile_b),)

    # Advisory cost estimate (memory-bound kernel): helps XLA schedule around it.
    itemsize = jnp.dtype(io_dtype).itemsize
    flops = 2 * B * (obs_dim * H1 + H1 * H2 + H2 * action_dim)
    transcendentals = B * (H2 + action_dim)                    # tanh + sigmoid
    bytes_accessed = (B * obs_dim * itemsize + B * action_dim * itemsize
                      + (obs_dim * H1 + H1 * H2 + H2 * action_dim) * itemsize
                      + (H1 + H2 + action_dim) * 4)

    in_specs = [
        pl.BlockSpec((tile_b, obs_dim),     lambda i: (i, 0)),  # obs: tiled over batch
        pl.BlockSpec((obs_dim, H1),         lambda i: (0, 0)),  # w1: VMEM-resident
        pl.BlockSpec((1, H1),               lambda i: (0, 0)),  # b1
        pl.BlockSpec((H1, H2),              lambda i: (0, 0)),  # w2 (BN-folded)
        pl.BlockSpec((1, H2),               lambda i: (0, 0)),  # b2 (BN-folded)
        pl.BlockSpec((H2, action_dim),      lambda i: (0, 0)),  # w3 (narrow, unpadded)
        pl.BlockSpec((1, action_dim),       lambda i: (0, 0)),  # b3
    ]
    out_spec = pl.BlockSpec((tile_b, action_dim), lambda i: (i, 0))

    return pl.pallas_call(
        actor_kernel,
        out_shape=jax.ShapeDtypeStruct((B, action_dim), io_dtype),
        grid=grid,
        in_specs=in_specs,
        out_specs=out_spec,
        compiler_params=pltpu.CompilerParams(
            dimension_semantics=("parallel",),
        ),
        cost_estimate=pl.CostEstimate(
            flops=int(flops),
            transcendentals=int(transcendentals),
            bytes_accessed=int(bytes_accessed),
        ),
    )(obs, prep["w1"], prep["b1"], prep["w2"], prep["b2"], prep["w3"], prep["b3"])


def init_params(key, observation_dim, action_dim):
    """Deterministic synthetic parameters matching the PyTorch module's shapes."""
    ks = jax.random.split(key, 8)

    def lin(kw, kb, fan_in, fan_out):
        bound = 1.0 / jnp.sqrt(jnp.float32(fan_in))
        w = jax.random.uniform(kw, (fan_in, fan_out), jnp.float32, -bound, bound)
        b = jax.random.uniform(kb, (1, fan_out), jnp.float32, -bound, bound)
        return w, b

    w1, b1 = lin(ks[0], ks[1], observation_dim, H1)
    w2, b2 = lin(ks[2], ks[3], H1, H2)
    w3, b3 = lin(ks[4], ks[5], H2, action_dim)

    # BatchNorm1d(128): affine params + non-trivial running stats so the
    # normalization path is actually exercised by the fold.
    gamma = 1.0 + 0.1 * jax.random.normal(ks[6], (1, H1), jnp.float32)
    beta = 0.05 * jax.random.normal(ks[7], (1, H1), jnp.float32)
    rmean = 0.1 * jnp.ones((1, H1), jnp.float32)
    rvar = 1.5 * jnp.ones((1, H1), jnp.float32)

    return dict(w1=w1, b1=b1, w2=w2, b2=b2, w3=w3, b3=b3,
                gamma=gamma, beta=beta, rmean=rmean, rvar=rvar)


def actor_reference(obs, p):
    """Pure-JAX reference following the original (un-folded) module in eval mode."""
    h1 = jnp.maximum(obs @ p["w1"] + p["b1"], 0.0)
    h1 = (h1 - p["rmean"]) * jax.lax.rsqrt(p["rvar"] + BN_EPS) * p["gamma"] + p["beta"]
    h2 = jnp.tanh(h1 @ p["w2"] + p["b2"])
    return jax.nn.sigmoid(h2 @ p["w3"] + p["b3"])


if __name__ == "__main__":
    key = jax.random.PRNGKey(0)
    k_obs, k_obs2, k_par = jax.random.split(key, 3)

    observation_dim = 16
    action_dim = 8
    params = init_params(k_par, observation_dim, action_dim)

    # --- f32 path, small batch (single tile), exact parity with the f32 reference ---
    B = 2
    obs = jax.random.normal(k_obs, (B, observation_dim), jnp.float32)
    prep_f32 = prepare_params(params, io_dtype=jnp.float32)
    out = jax.block_until_ready(actor_forward(obs, prep_f32))
    ref = actor_reference(obs, params)
    assert out.shape == (B, action_dim)
    assert jnp.allclose(out, ref, atol=3e-5, rtol=1e-5), "f32 mismatch vs reference"

    # --- multi-tile path with a ragged last block (exercises grid > 1 + masked write) ---
    B2 = 20
    obs2 = jax.random.normal(k_obs2, (B2, observation_dim), jnp.float32)
    out2 = jax.block_until_ready(actor_forward(obs2, prep_f32))
    ref2 = actor_reference(obs2, params)
    assert out2.shape == (B2, action_dim)
    assert jnp.allclose(out2, ref2, atol=3e-5, rtol=1e-5), "tiled f32 mismatch vs reference"

    # --- bf16 I/O path (v6e/v7x fast path: half HBM bytes, f32 accumulation) ---
    prep_bf16 = prepare_params(params, io_dtype=jnp.bfloat16)
    out_bf16 = jax.block_until_ready(actor_forward(obs2, prep_bf16))
    assert out_bf16.dtype == jnp.bfloat16
    assert jnp.allclose(out_bf16.astype(jnp.float32), ref2, atol=2e-2, rtol=2e-2), \
        "bf16 mismatch vs reference"

    print("KERNEL_OK")
</pallas_src>

<mosaic_0001>
module attributes {stable_mosaic.version = 11 : i64} {
  func.func @actor_kernel(%arg0: i32, %arg1: memref<2x16xf32, #tpu.memory_space<vmem>>, %arg2: memref<16x128xf32, #tpu.memory_space<vmem>>, %arg3: memref<1x128xf32, #tpu.memory_space<vmem>>, %arg4: memref<128x64xf32, #tpu.memory_space<vmem>>, %arg5: memref<1x64xf32, #tpu.memory_space<vmem>>, %arg6: memref<64x8xf32, #tpu.memory_space<vmem>>, %arg7: memref<1x8xf32, #tpu.memory_space<vmem>>, %arg8: memref<2x8xf32, #tpu.memory_space<vmem>>) attributes {dimension_semantics = [#tpu.dimension_semantics<parallel>], iteration_bounds = array<i64: 1>, scalar_prefetch = 0 : i64, scratch_operands = 0 : i64, tpu.core_type = #tpu.core_type<tc>, window_params = [{transform_indices = @transform_0, window_bounds = array<i64: 2, 16>}, {pipeline_mode = #tpu.pipeline_mode<synchronous>, transform_indices = @transform_1, window_bounds = array<i64: 16, 128>}, {pipeline_mode = #tpu.pipeline_mode<synchronous>, transform_indices = @transform_2, window_bounds = array<i64: 1, 128>}, {pipeline_mode = #tpu.pipeline_mode<synchronous>, transform_indices = @transform_3, window_bounds = array<i64: 128, 64>}, {pipeline_mode = #tpu.pipeline_mode<synchronous>, transform_indices = @transform_4, window_bounds = array<i64: 1, 64>}, {pipeline_mode = #tpu.pipeline_mode<synchronous>, transform_indices = @transform_5, window_bounds = array<i64: 64, 8>}, {pipeline_mode = #tpu.pipeline_mode<synchronous>, transform_indices = @transform_6, window_bounds = array<i64: 1, 8>}, {transform_indices = @transform_7, window_bounds = array<i64: 2, 8>}]} {
    %c0 = arith.constant 0 : index
    %c0_0 = arith.constant 0 : index
    %0 = vector.load %arg1[%c0, %c0_0] : memref<2x16xf32, #tpu.memory_space<vmem>>, vector<2x16xf32>
    %c0_1 = arith.constant 0 : index
    %c0_2 = arith.constant 0 : index
    %1 = vector.load %arg2[%c0_1, %c0_2] : memref<16x128xf32, #tpu.memory_space<vmem>>, vector<16x128xf32>
    %cst = arith.constant dense<0.000000e+00> : vector<2x128xf32>
    %2 = tpu.matmul %0, %1, %cst {dimension_numbers = #tpu.dot_dimension_numbers<[1], [0], [0], [1], [0, 0, 1, 1], [], []>} : vector<2x16xf32>, vector<16x128xf32>, vector<2x128xf32> -> vector<2x128xf32>
    %c0_3 = arith.constant 0 : index
    %c0_4 = arith.constant 0 : index
    %3 = vector.load %arg3[%c0_3, %c0_4] : memref<1x128xf32, #tpu.memory_space<vmem>>, vector<1x128xf32>
    %4 = vector.broadcast %3 : vector<1x128xf32> to vector<2x128xf32>
    %5 = arith.addf %2, %4 : vector<2x128xf32>
    %cst_5 = arith.constant 0.000000e+00 : f32
    %6 = vector.broadcast %cst_5 : f32 to vector<2x128xf32>
    %7 = arith.maximumf %5, %6 : vector<2x128xf32>
    %c0_6 = arith.constant 0 : index
    %c0_7 = arith.constant 0 : index
    %8 = vector.load %arg4[%c0_6, %c0_7] : memref<128x64xf32, #tpu.memory_space<vmem>>, vector<128x64xf32>
    %cst_8 = arith.constant dense<0.000000e+00> : vector<2x64xf32>
    %9 = tpu.matmul %7, %8, %cst_8 {dimension_numbers = #tpu.dot_dimension_numbers<[1], [0], [0], [1], [0, 0, 1, 1], [], []>} : vector<2x128xf32>, vector<128x64xf32>, vector<2x64xf32> -> vector<2x64xf32>
    %c0_9 = arith.constant 0 : index
    %c0_10 = arith.constant 0 : index
    %10 = vector.load %arg5[%c0_9, %c0_10] : memref<1x64xf32, #tpu.memory_space<vmem>>, vector<1x64xf32>
    %11 = vector.broadcast %10 : vector<1x64xf32> to vector<2x64xf32>
    %12 = arith.addf %9, %11 : vector<2x64xf32>
    %13 = math.tanh %12 : vector<2x64xf32>
    %c0_11 = arith.constant 0 : index
    %c0_12 = arith.constant 0 : index
    %14 = vector.load %arg6[%c0_11, %c0_12] : memref<64x8xf32, #tpu.memory_space<vmem>>, vector<64x8xf32>
    %cst_13 = arith.constant dense<0.000000e+00> : vector<2x8xf32>
    %15 = tpu.matmul %13, %14, %cst_13 {dimension_numbers = #tpu.dot_dimension_numbers<[1], [0], [0], [1], [0, 0, 1, 1], [], []>} : vector<2x64xf32>, vector<64x8xf32>, vector<2x8xf32> -> vector<2x8xf32>
    %c0_14 = arith.constant 0 : index
    %c0_15 = arith.constant 0 : index
    %16 = vector.load %arg7[%c0_14, %c0_15] : memref<1x8xf32, #tpu.memory_space<vmem>>, vector<1x8xf32>
    %17 = vector.broadcast %16 : vector<1x8xf32> to vector<2x8xf32>
    %18 = arith.addf %15, %17 : vector<2x8xf32>
    %19 = arith.negf %18 : vector<2x8xf32>
    %20 = math.exp %19 : vector<2x8xf32>
    %cst_16 = arith.constant 1.000000e+00 : f32
    %21 = vector.broadcast %cst_16 : f32 to vector<2x8xf32>
    %22 = arith.addf %21, %20 : vector<2x8xf32>
    %23 = arith.divf %21, %22 : vector<2x8xf32>
    %c0_17 = arith.constant 0 : index
    %c0_18 = arith.constant 0 : index
    %24 = vector.load %arg8[%c0_17, %c0_18] : memref<2x8xf32, #tpu.memory_space<vmem>>, vector<2x8xf32>
    tpu.vector_store %arg8[%c0_17, %c0_18], %23 {strides = array<i32>} : memref<2x8xf32, #tpu.memory_space<vmem>>, vector<2x8xf32>,
    return
  }
  func.func @transform_0(%arg0: i32) -> (i32, i32) {
    %c0_i32 = arith.constant 0 : i32
    %c0_i32_0 = arith.constant 0 : i32
    return %arg0, %c0_i32 : i32, i32
  }
  func.func @transform_1(%arg0: i32) -> (i32, i32) {
    %c0_i32 = arith.constant 0 : i32
    %c0_i32_0 = arith.constant 0 : i32
    %c0_i32_1 = arith.constant 0 : i32
    return %c0_i32, %c0_i32_0 : i32, i32
  }
  func.func @transform_2(%arg0: i32) -> (i32, i32) {
    %c0_i32 = arith.constant 0 : i32
    %c0_i32_0 = arith.constant 0 : i32
    %c0_i32_1 = arith.constant 0 : i32
    return %c0_i32, %c0_i32_0 : i32, i32
  }
  func.func @transform_3(%arg0: i32) -> (i32, i32) {
    %c0_i32 = arith.constant 0 : i32
    %c0_i32_0 = arith.constant 0 : i32
    %c0_i32_1 = arith.constant 0 : i32
    return %c0_i32, %c0_i32_0 : i32, i32
  }
  func.func @transform_4(%arg0: i32) -> (i32, i32) {
    %c0_i32 = arith.constant 0 : i32
    %c0_i32_0 = arith.constant 0 : i32
    %c0_i32_1 = arith.constant 0 : i32
    return %c0_i32, %c0_i32_0 : i32, i32
  }
  func.func @transform_5(%arg0: i32) -> (i32, i32) {
    %c0_i32 = arith.constant 0 : i32
    %c0_i32_0 = arith.constant 0 : i32
    %c0_i32_1 = arith.constant 0 : i32
    return %c0_i32, %c0_i32_0 : i32, i32
  }
  func.func @transform_6(%arg0: i32) -> (i32, i32) {
    %c0_i32 = arith.constant 0 : i32
    %c0_i32_0 = arith.constant 0 : i32
    %c0_i32_1 = arith.constant 0 : i32
    return %c0_i32, %c0_i32_0 : i32, i32
  }
  func.func @transform_7(%arg0: i32) -> (i32, i32) {
    %c0_i32 = arith.constant 0 : i32
    %c0_i32_0 = arith.constant 0 : i32
    return %arg0, %c0_i32 : i32, i32
  }
}

</mosaic_0001>

<llo_original>
// kernel: tpu_custom_call.1
$region0: #{tpu_custom_call.1}
  #allocation0 [shape = 'u32[]', space=smem, size = 0x4, offset = 0x4, fixed_abs, tag = 'smem constant byte address 0x4 - core index']
  #allocation1 [shape = 'u32[144,128]{1,0:T(1,128)}', space=vmem, size = 0x12000, scoped, tag = 'internal scratch']
  %s0 = inlined_call_operand.vmem [shape: f32[2,16], index: 0, kind: input, shape index: {}]
  %s1 = inlined_call_operand.vmem [shape: f32[16,128], index: 1, kind: input, shape index: {}]
  %s2 = inlined_call_operand.vmem [shape: f32[1,128], index: 2, kind: input, shape index: {}]
  %s3 = inlined_call_operand.vmem [shape: f32[128,64], index: 3, kind: input, shape index: {}]
  %s4 = inlined_call_operand.vmem [shape: f32[1,64], index: 4, kind: input, shape index: {}]
  %s5 = inlined_call_operand.vmem [shape: f32[64,8], index: 5, kind: input, shape index: {}]
  %s6 = inlined_call_operand.vmem [shape: f32[1,8], index: 6, kind: input, shape index: {}]
  %s7 = inlined_call_operand.hbm [shape: f32[2,8], index: 7, kind: output, shape index: {}]
  %s8 = sld [smem:[#allocation0]]
  $region38: #{tpu_custom_call.1} parent=0
    _
  %s10 = ssub.s32 1, %s8
  %s11 = scalar_select 0, %s10, %s8
  $region1: #{tpu_custom_call.1} parent=0
    #allocation2 [shape = 'u8[1024]{0}', space=vmem, size = 0x400, scoped, tag = 'output window, operand 0, single buffered']
    #allocation3 [shape = 's32[1]{0}', space=sflag, size = 0x4, scoped, tag = 'scoped memory for tpu_custom_call.1']
    %12 = vsyncpa [#allocation3], 0
    // Predicated region
    $region2: #{tpu_custom_call.1} parent=1 // pred_check
      _
    $region3: #{tpu_custom_call.1} parent=1 // pred_check_branch
      %14 = sbr.rel (0) target = $region5
    $region4: #{tpu_custom_call.1} parent=1 // pred_region
      _
    $region5: #{tpu_custom_call.1} parent=1 // pred_fallthru
      _
    // Predicated region
    $region6: #{tpu_custom_call.1} parent=1 // pred_check
      _
    $region7: #{tpu_custom_call.1} parent=1 // pred_check_branch
      %16 = sbr.rel (0) target = $region9
    $region8: #{tpu_custom_call.1} parent=1 // pred_region
      _
    $region9: #{tpu_custom_call.1} parent=1 // pred_fallthru
      _
    // Predicated region
    $region10: #{tpu_custom_call.1} parent=1 // pred_check
      _
    $region11: #{tpu_custom_call.1} parent=1 // pred_check_branch
      %18 = sbr.rel (0) target = $region13
    $region12: #{tpu_custom_call.1} parent=1 // pred_region
      _
    $region13: #{tpu_custom_call.1} parent=1 // pred_fallthru
      _
    // Predicated region
    $region14: #{tpu_custom_call.1} parent=1 // pred_check
      _
    $region15: #{tpu_custom_call.1} parent=1 // pred_check_branch
      %20 = sbr.rel (0) target = $region17
    $region16: #{tpu_custom_call.1} parent=1 // pred_region
      _
    $region17: #{tpu_custom_call.1} parent=1 // pred_fallthru
      _
    // Predicated region
    $region18: #{tpu_custom_call.1} parent=1 // pred_check
      _
    $region19: #{tpu_custom_call.1} parent=1 // pred_check_branch
      %22 = sbr.rel (0) target = $region21
    $region20: #{tpu_custom_call.1} parent=1 // pred_region
      _
    $region21: #{tpu_custom_call.1} parent=1 // pred_fallthru
      _
    // Predicated region
    $region22: #{tpu_custom_call.1} parent=1 // pred_check
      _
    $region23: #{tpu_custom_call.1} parent=1 // pred_check_branch
      %24 = sbr.rel (0) target = $region25
    $region24: #{tpu_custom_call.1} parent=1 // pred_region
      _
    $region25: #{tpu_custom_call.1} parent=1 // pred_fallthru
      _
    // Predicated region
    $region26: #{tpu_custom_call.1} parent=1 // pred_check
      _
    $region27: #{tpu_custom_call.1} parent=1 // pred_check_branch
      %26 = sbr.rel (0) target = $region29
    $region28: #{tpu_custom_call.1} parent=1 // pred_region
      _
    $region29: #{tpu_custom_call.1} parent=1 // pred_fallthru
      _
    %v27 = vld [vmem:[%s0] sm:$0x3]
    %v28 = vld [vmem:[%s1] sm:$0xff]
    %v29 = vld [vmem:[%s1 + $0x8] sm:$0xff]
    %v30 = vld [vmem:[%s2] sm:$0x1]
    %v32 = vlaneseq
    %v33 = vshrl.u32 %v32, 7
    %v34 = vsub.s32 0, %v33
    %v35 = vrot.slane %v30, %v34
    %vm37 = vcmask 130048
    %v39 = vsel %vm37, %v27, 0
    %41 = vmatprep.subr.mxu0 0.0
    %42 = vmatpush1.msra.mxu0 %v28
    %43 = vmatprep.subr.mxu0 0.0
    %44 = vmatpush1.msra.mxu0 %v29
    %45 = vmatprep.subr.mxu0 0.0
    %46 = vmatpush1.msra.mxu0 0.0
    %47 = vmatprep.subr.mxu0 0.0
    %48 = vmatpush1.msra.mxu0 0.0
    %49 = vmatprep.subr.mxu0 0.0
    %50 = vmatpush1.msra.mxu0 0.0
    %51 = vmatprep.subr.mxu0 0.0
    %52 = vmatpush1.msra.mxu0 0.0
    %53 = vmatprep.subr.mxu0 0.0
    %54 = vmatpush1.msra.mxu0 0.0
    %55 = vmatprep.subr.mxu0 0.0
    %56 = vmatpush1.msra.mxu0 0.0
    %57 = vmatprep.subr.mxu0 0.0
    %58 = vmatpush1.msra.mxu0 0.0
    %59 = vmatprep.subr.mxu0 0.0
    %60 = vmatpush1.msra.mxu0 0.0
    %61 = vmatprep.subr.mxu0 0.0
    %62 = vmatpush1.msra.mxu0 0.0
    %63 = vmatprep.subr.mxu0 0.0
    %64 = vmatpush1.msra.mxu0 0.0
    %65 = vmatprep.subr.mxu0 0.0
    %66 = vmatpush1.msra.mxu0 0.0
    %67 = vmatprep.subr.mxu0 0.0
    %68 = vmatpush1.msra.mxu0 0.0
    %69 = vmatprep.subr.mxu0 0.0
    %70 = vmatpush1.msra.mxu0 0.0
    %71 = vmatprep.subr.mxu0 0.0
    %72 = vmatpush1.msra.mxu0 0.0
    %73 = vmatprep.subr.mxu0 0.0
    %74 = vmatpush1.msra.mxu0 0.0
    %75 = vmatprep.subr.mxu0 0.0
    %76 = vmatpush1.msra.mxu0 0.0
    %77 = vmatprep.subr.mxu0 0.0
    %78 = vmatpush1.msra.mxu0 0.0
    %79 = vmatprep.subr.mxu0 0.0
    %80 = vmatpush1.msra.mxu0 0.0
    %81 = vmatprep.subr.mxu0 0.0
    %82 = vmatpush1.msra.mxu0 0.0
    %83 = vmatprep.subr.mxu0 0.0
    %84 = vmatpush1.msra.mxu0 0.0
    %85 = vmatprep.subr.mxu0 0.0
    %86 = vmatpush1.msra.mxu0 0.0
    %87 = vmatprep.subr.mxu0 0.0
    %88 = vmatpush1.msra.mxu0 0.0
    %89 = vmatprep.subr.mxu0 0.0
    %90 = vmatpush1.msra.mxu0 0.0
    %91 = vmatprep.subr.mxu0 0.0
    %92 = vmatpush1.msra.mxu0 0.0
    %93 = vmatprep.subr.mxu0 0.0
    %94 = vmatpush1.msra.mxu0 0.0
    %95 = vmatprep.subr.mxu0 0.0
    %96 = vmatpush1.msra.mxu0 0.0
    %97 = vmatprep.subr.mxu0 0.0
    %98 = vmatpush1.msra.mxu0 0.0
    %99 = vmatprep.subr.mxu0 0.0
    %100 = vmatpush1.msra.mxu0 0.0
    %101 = vmatprep.subr.mxu0 0.0
    %102 = vmatpush1.msra.mxu0 0.0
    %103 = vmatprep.subr.mxu0 0.0
    %104 = vmatpush1.msra.mxu0 0.0
    %105 = vmatprep.mubr.f32.mxu0 0.0
    %106 = vmatmul.mubr.f32.gmra.mrb[0].mxu0 %v39
    %v107 = vpop.f32.mrb[0].mxu0
    %v108 = vadd.f32 %v35, %v107
    %v109 = vpop.f32.mrb[0].mxu0
    %110 = vdwg.mxu0
    %v111 = vmax.f32 %v108, 0.0
    %v112 = vld [vmem:[%s3] sm:$0xff]
    %v113 = vld [vmem:[%s3 + $0x8] sm:$0xff]
    %v114 = vld [vmem:[%s3 + $0x10] sm:$0xff]
    %v115 = vld [vmem:[%s3 + $0x18] sm:$0xff]
    %v116 = vld [vmem:[%s3 + $0x20] sm:$0xff]
    %v117 = vld [vmem:[%s3 + $0x28] sm:$0xff]
    %v118 = vld [vmem:[%s3 + $0x30] sm:$0xff]
    %v119 = vld [vmem:[%s3 + $0x38] sm:$0xff]
    %v120 = vld [vmem:[%s3 + $0x40] sm:$0xff]
    %v121 = vld [vmem:[%s3 + $0x48] sm:$0xff]
    %v122 = vld [vmem:[%s3 + $0x50] sm:$0xff]
    %v123 = vld [vmem:[%s3 + $0x58] sm:$0xff]
    %v124 = vld [vmem:[%s3 + $0x60] sm:$0xff]
    %v125 = vld [vmem:[%s3 + $0x68] sm:$0xff]
    %v126 = vld [vmem:[%s3 + $0x70] sm:$0xff]
    %v127 = vld [vmem:[%s3 + $0x78] sm:$0xff]
    %v128 = vld [vmem:[%s4] sm:$0x1]
    %v130 = vlaneseq
    %v131 = vshrl.u32 %v130, 7
    %v132 = vsub.s32 0, %v131
    %v133 = vrot.slane %v128, %v132
    %135 = vmatprep.subr.mxu0 0.0
    %136 = vmatpush1.msra.mxu0 %v112
    %137 = vmatprep.subr.mxu0 0.0
    %138 = vmatpush1.msra.mxu0 %v113
    %139 = vmatprep.subr.mxu0 0.0
    %140 = vmatpush1.msra.mxu0 %v114
    %141 = vmatprep.subr.mxu0 0.0
    %142 = vmatpush1.msra.mxu0 %v115
    %143 = vmatprep.subr.mxu0 0.0
    %144 = vmatpush1.msra.mxu0 %v116
    %145 = vmatprep.subr.mxu0 0.0
    %146 = vmatpush1.msra.mxu0 %v117
    %147 = vmatprep.subr.mxu0 0.0
    %148 = vmatpush1.msra.mxu0 %v118
    %149 = vmatprep.subr.mxu0 0.0
    %150 = vmatpush1.msra.mxu0 %v119
    %151 = vmatprep.subr.mxu0 0.0
    %152 = vmatpush1.msra.mxu0 %v120
    %153 = vmatprep.subr.mxu0 0.0
    %154 = vmatpush1.msra.mxu0 %v121
    %155 = vmatprep.subr.mxu0 0.0
    %156 = vmatpush1.msra.mxu0 %v122
    %157 = vmatprep.subr.mxu0 0.0
    %158 = vmatpush1.msra.mxu0 %v123
    %159 = vmatprep.subr.mxu0 0.0
    %160 = vmatpush1.msra.mxu0 %v124
    %161 = vmatprep.subr.mxu0 0.0
    %162 = vmatpush1.msra.mxu0 %v125
    %163 = vmatprep.subr.mxu0 0.0
    %164 = vmatpush1.msra.mxu0 %v126
    %165 = vmatprep.subr.mxu0 0.0
    %166 = vmatpush1.msra.mxu0 %v127
    %167 = vmatprep.subr.mxu0 0.0
    %168 = vmatpush1.msra.mxu0 0.0
    %169 = vmatprep.subr.mxu0 0.0
    %170 = vmatpush1.msra.mxu0 0.0
    %171 = vmatprep.subr.mxu0 0.0
    %172 = vmatpush1.msra.mxu0 0.0
    %173 = vmatprep.subr.mxu0 0.0
    %174 = vmatpush1.msra.mxu0 0.0
    %175 = vmatprep.subr.mxu0 0.0
    %176 = vmatpush1.msra.mxu0 0.0
    %177 = vmatprep.subr.mxu0 0.0
    %178 = vmatpush1.msra.mxu0 0.0
    %179 = vmatprep.subr.mxu0 0.0
    %180 = vmatpush1.msra.mxu0 0.0
    %181 = vmatprep.subr.mxu0 0.0
    %182 = vmatpush1.msra.mxu0 0.0
    %183 = vmatprep.subr.mxu0 0.0
    %184 = vmatpush1.msra.mxu0 0.0
    %185 = vmatprep.subr.mxu0 0.0
    %186 = vmatpush1.msra.mxu0 0.0
    %187 = vmatprep.subr.mxu0 0.0
    %188 = vmatpush1.msra.mxu0 0.0
    %189 = vmatprep.subr.mxu0 0.0
    %190 = vmatpush1.msra.mxu0 0.0
    %191 = vmatprep.subr.mxu0 0.0
    %192 = vmatpush1.msra.mxu0 0.0
    %193 = vmatprep.subr.mxu0 0.0
    %194 = vmatpush1.msra.mxu0 0.0
    %195 = vmatprep.subr.mxu0 0.0
    %196 = vmatpush1.msra.mxu0 0.0
    %197 = vmatprep.subr.mxu0 0.0
    %198 = vmatpush1.msra.mxu0 0.0
    %199 = vmatprep.mubr.f32.mxu0 0.0
    %200 = vmatmul.mubr.f32.gmra.mrb[0].mxu0 %v111
    %v201 = vpop.f32.mrb[0].mxu0
    %v202 = vadd.f32 %v133, %v201
    %v203 = vpop.f32.mrb[0].mxu0
    %204 = vdwg.mxu0
    %v205 = vtanh.pop %v202
    %v206 = vld [vmem:[%s5] sm:$0xff]
    %v207 = vld [vmem:[%s5 + $0x8] sm:$0xff]
    %v208 = vld [vmem:[%s5 + $0x10] sm:$0xff]
    %v209 = vld [vmem:[%s5 + $0x18] sm:$0xff]
    %v210 = vld [vmem:[%s5 + $0x20] sm:$0xff]
    %v211 = vld [vmem:[%s5 + $0x28] sm:$0xff]
    %v212 = vld [vmem:[%s5 + $0x30] sm:$0xff]
    %v213 = vld [vmem:[%s5 + $0x38] sm:$0xff]
    %v214 = vld [vmem:[%s6] sm:$0x1]
    %v216 = vlaneseq
    %v217 = vshrl.u32 %v216, 7
    %v218 = vsub.s32 0, %v217
    %v219 = vrot.slane %v214, %v218
    %vm221 = vcmask 523264
    %v223 = vsel %vm221, %v205, 0
    %225 = vmatprep.subr.mxu0 0.0
    %226 = vmatpush1.msra.mxu0 %v206
    %227 = vmatprep.subr.mxu0 0.0
    %228 = vmatpush1.msra.mxu0 %v207
    %229 = vmatprep.subr.mxu0 0.0
    %230 = vmatpush1.msra.mxu0 %v208
    %231 = vmatprep.subr.mxu0 0.0
    %232 = vmatpush1.msra.mxu0 %v209
    %233 = vmatprep.subr.mxu0 0.0
    %234 = vmatpush1.msra.mxu0 %v210
    %235 = vmatprep.subr.mxu0 0.0
    %236 = vmatpush1.msra.mxu0 %v211
    %237 = vmatprep.subr.mxu0 0.0
    %238 = vmatpush1.msra.mxu0 %v212
    %239 = vmatprep.subr.mxu0 0.0
    %240 = vmatpush1.msra.mxu0 %v213
    %241 = vmatprep.subr.mxu0 0.0
    %242 = vmatpush1.msra.mxu0 0.0
    %243 = vmatprep.subr.mxu0 0.0
    %244 = vmatpush1.msra.mxu0 0.0
    %245 = vmatprep.subr.mxu0 0.0
    %246 = vmatpush1.msra.mxu0 0.0
    %247 = vmatprep.subr.mxu0 0.0
    %248 = vmatpush1.msra.mxu0 0.0
    %249 = vmatprep.subr.mxu0 0.0
    %250 = vmatpush1.msra.mxu0 0.0
    %251 = vmatprep.subr.mxu0 0.0
    %252 = vmatpush1.msra.mxu0 0.0
    %253 = vmatprep.subr.mxu0 0.0
    %254 = vmatpush1.msra.mxu0 0.0
    %255 = vmatprep.subr.mxu0 0.0
    %256 = vmatpush1.msra.mxu0 0.0
    %257 = vmatprep.subr.mxu0 0.0
    %258 = vmatpush1.msra.mxu0 0.0
    %259 = vmatprep.subr.mxu0 0.0
    %260 = vmatpush1.msra.mxu0 0.0
    %261 = vmatprep.subr.mxu0 0.0
    %262 = vmatpush1.msra.mxu0 0.0
    %263 = vmatprep.subr.mxu0 0.0
    %264 = vmatpush1.msra.mxu0 0.0
    %265 = vmatprep.subr.mxu0 0.0
    %266 = vmatpush1.msra.mxu0 0.0
    %267 = vmatprep.subr.mxu0 0.0
    %268 = vmatpush1.msra.mxu0 0.0
    %269 = vmatprep.subr.mxu0 0.0
    %270 = vmatpush1.msra.mxu0 0.0
    %271 = vmatprep.subr.mxu0 0.0
    %272 = vmatpush1.msra.mxu0 0.0
    %273 = vmatprep.subr.mxu0 0.0
    %274 = vmatpush1.msra.mxu0 0.0
    %275 = vmatprep.subr.mxu0 0.0
    %276 = vmatpush1.msra.mxu0 0.0
    %277 = vmatprep.subr.mxu0 0.0
    %278 = vmatpush1.msra.mxu0 0.0
    %279 = vmatprep.subr.mxu0 0.0
    %280 = vmatpush1.msra.mxu0 0.0
    %281 = vmatprep.subr.mxu0 0.0
    %282 = vmatpush1.msra.mxu0 0.0
    %283 = vmatprep.subr.mxu0 0.0
    %284 = vmatpush1.msra.mxu0 0.0
    %285 = vmatprep.subr.mxu0 0.0
    %286 = vmatpush1.msra.mxu0 0.0
    %287 = vmatprep.subr.mxu0 0.0
    %288 = vmatpush1.msra.mxu0 0.0
    %289 = vmatprep.mubr.f32.mxu0 0.0
    %290 = vmatmul.mubr.f32.gmra.mrb[0].mxu0 %v223
    %v291 = vpop.f32.mrb[0].mxu0
    %v292 = vadd.f32 %v219, %v291
    %v293 = vpop.f32.mrb[0].mxu0
    %294 = vdwg.mxu0
    %v295 = vxor.u32 %v292, 2147483648
    %v296 = vmul.f32 %v295, 1.442695
    %v297 = vpow.pop %v296
    %v298 = vadd.f32 %v297, 1.0
    %v299 = vrcp.pop %v298
    %v300 = vmul.f32 1.0, %v299
    %vm301 = vcmask 58368
    %302 = vst.msk [vmem:[#allocation2] sm:$0x3] %vm301, %v300
    // Predicated region
    $region30: #{tpu_custom_call.1} parent=1 // pred_check
      _
    $region31: #{tpu_custom_call.1} parent=1 // pred_check_branch
      %304 = sbr.rel (0) target = $region33
    $region32: #{tpu_custom_call.1} parent=1 // pred_region
      %s306 = ssub.s32 32, 32
      %307 = vsyncadd [#allocation3], %s306
      %s309 = sshll.u32 [#allocation2], 4
      %s310 = int_to_ptr.vmem [resolvable:$true] %s309
      %312 = dma.vmem_to_hbm [thread:$0]  %s310, 32, %s7, [#allocation3]
    $region33: #{tpu_custom_call.1} parent=1 // pred_fallthru
      _
    // Predicated region
    $region34: #{tpu_custom_call.1} parent=1 // pred_check
      _
    $region35: #{tpu_custom_call.1} parent=1 // pred_check_branch
      %314 = sbr.rel (0) target = $region37
    $region36: #{tpu_custom_call.1} parent=1 // pred_region
      %315 = dma.done [#allocation3], 32
    $region37: #{tpu_custom_call.1} parent=1 // pred_fallthru
      _
    %316 = vsyncpa [#allocation3], 1

</llo_original>
